<compile_context>
chip_gen: v5e
topology: v5e:2x2
jax: 0.10.0
libtpu: 0.0.40
codegen_flags: <defaults>
</compile_context>

<pallas_src>
import functools

import jax
import jax.numpy as jnp
from jax import lax
from jax.experimental import pallas as pl
from jax.experimental.pallas import tpu as pltpu

LN_EPS = 1e-5                      # torch.nn.LayerNorm default
_REQUESTED_TILE_ROWS = 512


def _round_up(x, m):
    return (x + m - 1) // m * m


def _vmem_budgets():
    """Per-generation VMEM limit + tile budget (headroom for Mosaic scratch)."""
    try:
        cap = int(pltpu.get_tpu_info().vmem_capacity_bytes)
    except Exception:
        cap = 64 * 1024 * 1024                       # conservative (v7x per-core)
    limit = min(cap * 3 // 4, 100 * 1024 * 1024)     # ~96 MiB on 128 MiB parts, 48 MiB on v7x
    limit = max(limit, 32 * 1024 * 1024)
    budget = limit * 4 // 5                          # leave headroom for internal scratch
    return int(limit), int(budget)


# ---------------- fused LayerNorm + Linear, resident-weight path ----------------
def _prenorm_linear_kernel(x_ref, g_ref, b_ref, w_ref, fb_ref, o_ref):
    # LayerNorm over the last dim in f32 (biased variance, like torch).
    x = x_ref[...].astype(jnp.float32)                       # (tr, D)
    mean = jnp.mean(x, axis=-1, keepdims=True)
    var = jnp.mean((x - mean) ** 2, axis=-1, keepdims=True)
    inv = lax.rsqrt(var + LN_EPS)
    y = (x - mean) * inv * g_ref[...] + b_ref[...]           # gamma/beta already f32

    # fn = Linear: bf16 operands on the MXU, f32 accumulation.
    acc = jnp.dot(y.astype(jnp.bfloat16), w_ref[...],
                  preferred_element_type=jnp.float32)        # (tr, Dout_p)
    o_ref[...] = (acc + fb_ref[...]).astype(o_ref.dtype)


# ---------------- fused LayerNorm + Linear, K-tiled (streamed weight) path ----------------
def _prenorm_linear_ktiled_kernel(x_ref, g_ref, b_ref, w_ref, fb_ref, o_ref,
                                  mean_sc, inv_sc, acc_sc, *, tk):
    k = pl.program_id(1)

    @pl.when(k == 0)
    def _():
        xf = x_ref[...].astype(jnp.float32)                  # (tr, D) full row needed for LN
        mean = jnp.mean(xf, axis=-1, keepdims=True)
        var = jnp.mean((xf - mean) ** 2, axis=-1, keepdims=True)
        mean_sc[...] = mean
        inv_sc[...] = lax.rsqrt(var + LN_EPS)
        acc_sc[...] = jnp.zeros_like(acc_sc)

    start = pl.multiple_of(k * tk, tk)
    xk = x_ref[:, pl.ds(start, tk)].astype(jnp.float32)      # (tr, tk)
    yk = (xk - mean_sc[...]) * inv_sc[...] * g_ref[...] + b_ref[...]
    acc_sc[...] += jnp.dot(yk.astype(jnp.bfloat16), w_ref[...],
                           preferred_element_type=jnp.float32)

    @pl.when(k == pl.num_programs(1) - 1)
    def _():
        o_ref[...] = (acc_sc[...] + fb_ref[...]).astype(o_ref.dtype)


# ------------------------------ tile selection ------------------------------
def _cap_steps(tile_rows, R):
    # keep the row grid at >= ~4 steps (2 per v7x TensorCore) when R allows
    tile_rows = min(tile_rows, max(8, _round_up((R + 3) // 4, 8)))
    tile_rows = min(tile_rows, _round_up(R, 8))
    return max(8, (tile_rows // 8) * 8)


def _pick_tile_rows_simple(R, D, dout_p, x_item, out_item, budget):
    weight_bytes = D * dout_p * 2                    # bf16 weight, Buffered(1): one copy
    const_bytes = (2 * D + dout_p) * 4               # gamma/beta/bias f32, Buffered(1)
    per_row = (2 * D * x_item                        # streamed x tile (double-buffered DMA)
               + 2 * dout_p * out_item               # out tile (double-buffered DMA)
               + 10 * D + 4 * dout_p)                # x_f32 + y_f32 + y_bf16 + f32 acc
    avail = budget - weight_bytes - const_bytes
    if avail < 8 * per_row:
        return None                                  # weight too big -> use K-tiled path
    tr = min(_REQUESTED_TILE_ROWS, avail // per_row)
    return int(_cap_steps(tr, R))


def _pick_k_tile(D):
    for tk in (512, 256, 128):                       # 256-multiples preferred (v6e/v7x MXU)
        if D % tk == 0:
            return tk
    return None


def _pick_tile_rows_ktiled(R, D, tk, dout_p, x_item, out_item, budget):
    w_tile_bytes = 2 * tk * dout_p * 2               # streamed bf16 weight tile (2 buffers)
    const_bytes = dout_p * 4 + 4 * tk * 4            # bias (Buffered(1)) + gamma/beta slices
    per_row = (2 * D * x_item                        # resident x tile (2 buffers over rows)
               + 2 * dout_p * out_item               # out tile (2 buffers)
               + 4 * dout_p                          # f32 accumulator scratch
               + 4 * D                               # full-row f32 cast for LN stats
               + 10 * tk + 8)                        # per-k intermediates + mean/inv scratch
    avail = budget - w_tile_bytes - const_bytes
    tr = min(_REQUESTED_TILE_ROWS, max(8, avail // max(per_row, 1)))
    return int(_cap_steps(tr, R))


# ------------------------------ pallas_call wrappers ------------------------------
def _call_simple(x2d, g2, bt2, w_p, fb_p, tile_rows, dout_p, vmem_limit):
    R, D = x2d.shape
    grid = ((R + tile_rows - 1) // tile_rows,)
    return pl.pallas_call(
        _prenorm_linear_kernel,
        out_shape=jax.ShapeDtypeStruct((R, dout_p), x2d.dtype),
        grid_spec=pltpu.PrefetchScalarGridSpec(
            num_scalar_prefetch=0,
            grid=grid,
            in_specs=[
                pl.BlockSpec((tile_rows, D), lambda i: (i, 0)),            # x (streamed)
                pl.BlockSpec((1, D), lambda i: (0, 0),
                             pipeline_mode=pl.Buffered(1)),                # gamma (resident)
                pl.BlockSpec((1, D), lambda i: (0, 0),
                             pipeline_mode=pl.Buffered(1)),                # beta (resident)
                pl.BlockSpec((D, dout_p), lambda i: (0, 0),
                             pipeline_mode=pl.Buffered(1)),                # weight (resident)
                pl.BlockSpec((1, dout_p), lambda i: (0, 0),
                             pipeline_mode=pl.Buffered(1)),                # fn bias (resident)
            ],
            out_specs=pl.BlockSpec((tile_rows, dout_p), lambda i: (i, 0)),
        ),
        compiler_params=pltpu.CompilerParams(
            dimension_semantics=("parallel",),
            vmem_limit_bytes=int(vmem_limit),
        ),
    )(x2d, g2, bt2, w_p, fb_p)


def _call_ktiled(x2d, g2, bt2, w_p, fb_p, tile_rows, tk, dout_p, vmem_limit):
    R, D = x2d.shape
    grid = ((R + tile_rows - 1) // tile_rows, D // tk)
    return pl.pallas_call(
        functools.partial(_prenorm_linear_ktiled_kernel, tk=tk),
        out_shape=jax.ShapeDtypeStruct((R, dout_p), x2d.dtype),
        grid_spec=pltpu.PrefetchScalarGridSpec(
            num_scalar_prefetch=0,
            grid=grid,
            in_specs=[
                pl.BlockSpec((tile_rows, D), lambda i, k: (i, 0)),         # x resident over k
                pl.BlockSpec((1, tk), lambda i, k: (0, k)),                # gamma slice
                pl.BlockSpec((1, tk), lambda i, k: (0, k)),                # beta slice
                pl.BlockSpec((tk, dout_p), lambda i, k: (k, 0)),           # weight K-tile
                pl.BlockSpec((1, dout_p), lambda i, k: (0, 0),
                             pipeline_mode=pl.Buffered(1)),                # fn bias (resident)
            ],
            out_specs=pl.BlockSpec((tile_rows, dout_p), lambda i, k: (i, 0)),
            scratch_shapes=[
                pltpu.VMEM((tile_rows, 1), jnp.float32),                   # mean
                pltpu.VMEM((tile_rows, 1), jnp.float32),                   # rsqrt(var + eps)
                pltpu.VMEM((tile_rows, dout_p), jnp.float32),              # f32 accumulator
            ],
        ),
        compiler_params=pltpu.CompilerParams(
            dimension_semantics=("parallel", "arbitrary"),
            vmem_limit_bytes=int(vmem_limit),
        ),
    )(x2d, g2, bt2, w_p, fb_p)


# --------------------------------- top level ---------------------------------
def prenorm_linear_pallas(x2d, gamma, beta, w, b, *, force_ktiled=None):
    """fn(LayerNorm(x)) for fn = Linear, on a (rows, D) slab."""
    R, D = x2d.shape
    Dk, Dout = w.shape
    assert Dk == D

    vmem_limit, budget = _vmem_budgets()
    x_item = jnp.dtype(x2d.dtype).itemsize
    out_item = x_item

    # Output-column policy: lane-dense when already 128-aligned; unpadded masked
    # stores for narrow outputs; pad (then slice) only for wide ragged Dout.
    if Dout % 128 == 0 or Dout <= 128:
        dout_p = Dout
    else:
        dout_p = _round_up(Dout, 128)

    g2 = gamma.reshape(1, D).astype(jnp.float32)
    bt2 = beta.reshape(1, D).astype(jnp.float32)
    w_p = w.astype(jnp.bfloat16)
    fb = b.astype(jnp.float32)
    if dout_p != Dout:
        w_p = jnp.pad(w_p, ((0, 0), (0, dout_p - Dout)))
        fb = jnp.pad(fb, ((0, dout_p - Dout),))
    fb_p = fb.reshape(1, dout_p)

    tk = _pick_k_tile(D)
    weight_bytes = D * dout_p * 2
    tr_simple = _pick_tile_rows_simple(R, D, dout_p, x_item, out_item, budget)

    use_ktiled = force_ktiled
    if use_ktiled is None:
        use_ktiled = (tk is not None) and (tr_simple is None or weight_bytes > budget // 3)
    if use_ktiled and tk is None:
        use_ktiled = False   # ragged D: cannot K-tile without changing LN stats

    if use_ktiled:
        tr = _pick_tile_rows_ktiled(R, D, tk, dout_p, x_item, out_item, budget)
        out_p = _call_ktiled(x2d, g2, bt2, w_p, fb_p, tr, tk, dout_p, vmem_limit)
    else:
        # TODO(synk): if tr_simple is None here (huge ragged-D weight) a K/N-tiled
        # fallback with a padded-but-masked LN would be needed; use minimal tiles.
        tr = tr_simple if tr_simple is not None else 8
        out_p = _call_simple(x2d, g2, bt2, w_p, fb_p, tr, dout_p, vmem_limit)

    if dout_p != Dout:
        out_p = out_p[:, :Dout]
    return out_p


@jax.jit
def prenorm_forward(x, ln_gamma, ln_beta, fn_w, fn_b):
    """PreNorm.forward: fn(LayerNorm(x)) with fn = Linear.  x: (B, N, D)."""
    B, N, D = x.shape
    Dout = fn_w.shape[1]
    out2d = prenorm_linear_pallas(x.reshape(B * N, D), ln_gamma, ln_beta, fn_w, fn_b)
    return out2d.reshape(B, N, Dout)


def _prenorm_linear_ref(x2d, g, b, w, fb):
    mean = jnp.mean(x2d, axis=-1, keepdims=True)
    var = jnp.mean((x2d - mean) ** 2, axis=-1, keepdims=True)
    y = (x2d - mean) / jnp.sqrt(var + LN_EPS) * g + b
    return y @ w + fb


if __name__ == "__main__":
    key = jax.random.PRNGKey(0)
    k1, k2, k3, k4, k5, k6, k7, k8 = jax.random.split(key, 8)

    # ---- Test 1: small shapes (resident-weight path), matches the PyTorch spec ----
    B, N, D = 2, 8, 32
    x = jax.random.normal(k1, (B, N, D), dtype=jnp.float32)
    ln_gamma = jnp.ones((D,), dtype=jnp.float32)      # nn.LayerNorm default init
    ln_beta = jnp.zeros((D,), dtype=jnp.float32)
    fn_w = jax.random.normal(k2, (D, D), dtype=jnp.float32) * 0.02   # fn = Linear(D, D)
    fn_b = jax.random.normal(k3, (D,), dtype=jnp.float32) * 0.02

    out = prenorm_forward(x, ln_gamma, ln_beta, fn_w, fn_b)
    jax.block_until_ready(out)
    ref = _prenorm_linear_ref(x.reshape(B * N, D), ln_gamma, ln_beta, fn_w, fn_b)
    ref = ref.reshape(B, N, D)
    assert out.shape == ref.shape, "shape mismatch vs reference (test 1)"
    assert jnp.allclose(out, ref, atol=2e-2, rtol=2e-2), "mismatch vs reference (test 1)"

    # ---- Test 2: ragged row count + forced K-tiled (streamed weight) path ----
    B2, N2, D2, DOUT2 = 2, 50, 768, 384               # R=100 (ragged vs tile), nk=3
    x2 = jax.random.normal(k4, (B2 * N2, D2), dtype=jnp.float32)
    g2v = 1.0 + 0.1 * jax.random.normal(k5, (D2,), dtype=jnp.float32)
    b2v = 0.1 * jax.random.normal(k6, (D2,), dtype=jnp.float32)
    w2 = jax.random.normal(k7, (D2, DOUT2), dtype=jnp.float32) * 0.02
    fb2 = jax.random.normal(k8, (DOUT2,), dtype=jnp.float32) * 0.02

    out2 = prenorm_linear_pallas(x2, g2v, b2v, w2, fb2, force_ktiled=True)
    jax.block_until_ready(out2)
    ref2 = _prenorm_linear_ref(x2, g2v, b2v, w2, fb2)
    assert out2.shape == ref2.shape, "shape mismatch vs reference (test 2)"
    assert jnp.allclose(out2, ref2, atol=2e-2, rtol=2e-2), "mismatch vs reference (test 2)"

    print("KERNEL_OK")
</pallas_src>

<mosaic_0001>
module attributes {stable_mosaic.version = 11 : i64} {
  func.func @_prenorm_linear_kernel(%arg0: i32, %arg1: memref<8x32xf32, #tpu.memory_space<vmem>>, %arg2: memref<1x32xf32, #tpu.memory_space<vmem>>, %arg3: memref<1x32xf32, #tpu.memory_space<vmem>>, %arg4: memref<32x32xbf16, #tpu.memory_space<vmem>>, %arg5: memref<1x32xf32, #tpu.memory_space<vmem>>, %arg6: memref<8x32xf32, #tpu.memory_space<vmem>>) attributes {dimension_semantics = [#tpu.dimension_semantics<parallel>], iteration_bounds = array<i64: 2>, scalar_prefetch = 0 : i64, scratch_operands = 0 : i64, tpu.core_type = #tpu.core_type<tc>, window_params = [{transform_indices = @transform_0, window_bounds = array<i64: 8, 32>}, {pipeline_mode = #tpu.pipeline_mode<synchronous>, transform_indices = @transform_1, window_bounds = array<i64: 1, 32>}, {pipeline_mode = #tpu.pipeline_mode<synchronous>, transform_indices = @transform_2, window_bounds = array<i64: 1, 32>}, {pipeline_mode = #tpu.pipeline_mode<synchronous>, transform_indices = @transform_3, window_bounds = array<i64: 32, 32>}, {pipeline_mode = #tpu.pipeline_mode<synchronous>, transform_indices = @transform_4, window_bounds = array<i64: 1, 32>}, {transform_indices = @transform_5, window_bounds = array<i64: 8, 32>}]} {
    %c0 = arith.constant 0 : index
    %c0_0 = arith.constant 0 : index
    %0 = vector.load %arg1[%c0, %c0_0] : memref<8x32xf32, #tpu.memory_space<vmem>>, vector<8x32xf32>
    %cst = arith.constant dense<0.000000e+00> : vector<8xf32>
    %1 = vector.multi_reduction <add>, %0, %cst [1] : vector<8x32xf32> to vector<8xf32>
    %2 = vector.shape_cast %1 : vector<8xf32> to vector<8x1xf32>
    %cst_1 = arith.constant 3.200000e+01 : f32
    %3 = vector.broadcast %cst_1 : f32 to vector<8x1xf32>
    %4 = arith.divf %2, %3 : vector<8x1xf32>
    %5 = vector.broadcast %4 : vector<8x1xf32> to vector<8x32xf32>
    %6 = arith.subf %0, %5 : vector<8x32xf32>
    %7 = arith.mulf %6, %6 : vector<8x32xf32>
    %cst_2 = arith.constant dense<0.000000e+00> : vector<8xf32>
    %8 = vector.multi_reduction <add>, %7, %cst_2 [1] : vector<8x32xf32> to vector<8xf32>
    %9 = vector.shape_cast %8 : vector<8xf32> to vector<8x1xf32>
    %cst_3 = arith.constant 3.200000e+01 : f32
    %10 = vector.broadcast %cst_3 : f32 to vector<8x1xf32>
    %11 = arith.divf %9, %10 : vector<8x1xf32>
    %cst_4 = arith.constant 9.99999974E-6 : f32
    %12 = vector.broadcast %cst_4 : f32 to vector<8x1xf32>
    %13 = arith.addf %11, %12 : vector<8x1xf32>
    %14 = math.rsqrt %13 : vector<8x1xf32>
    %15 = vector.broadcast %4 : vector<8x1xf32> to vector<8x32xf32>
    %16 = arith.subf %0, %15 : vector<8x32xf32>
    %17 = vector.broadcast %14 : vector<8x1xf32> to vector<8x32xf32>
    %18 = arith.mulf %16, %17 : vector<8x32xf32>
    %c0_5 = arith.constant 0 : index
    %c0_6 = arith.constant 0 : index
    %19 = vector.load %arg2[%c0_5, %c0_6] : memref<1x32xf32, #tpu.memory_space<vmem>>, vector<1x32xf32>
    %20 = vector.broadcast %19 : vector<1x32xf32> to vector<8x32xf32>
    %21 = arith.mulf %18, %20 : vector<8x32xf32>
    %c0_7 = arith.constant 0 : index
    %c0_8 = arith.constant 0 : index
    %22 = vector.load %arg3[%c0_7, %c0_8] : memref<1x32xf32, #tpu.memory_space<vmem>>, vector<1x32xf32>
    %23 = vector.broadcast %22 : vector<1x32xf32> to vector<8x32xf32>
    %24 = arith.addf %21, %23 : vector<8x32xf32>
    %25 = arith.truncf %24 : vector<8x32xf32> to vector<8x32xbf16>
    %c0_9 = arith.constant 0 : index
    %c0_10 = arith.constant 0 : index
    %26 = vector.load %arg4[%c0_9, %c0_10] : memref<32x32xbf16, #tpu.memory_space<vmem>>, vector<32x32xbf16>
    %cst_11 = arith.constant dense<0.000000e+00> : vector<8x32xf32>
    %27 = tpu.matmul %25, %26, %cst_11 {dimension_numbers = #tpu.dot_dimension_numbers<[1], [0], [0], [1], [0, 0, 1, 1], [], []>} : vector<8x32xbf16>, vector<32x32xbf16>, vector<8x32xf32> -> vector<8x32xf32>
    %c0_12 = arith.constant 0 : index
    %c0_13 = arith.constant 0 : index
    %28 = vector.load %arg5[%c0_12, %c0_13] : memref<1x32xf32, #tpu.memory_space<vmem>>, vector<1x32xf32>
    %29 = vector.broadcast %28 : vector<1x32xf32> to vector<8x32xf32>
    %30 = arith.addf %27, %29 : vector<8x32xf32>
    %c0_14 = arith.constant 0 : index
    %c0_15 = arith.constant 0 : index
    %31 = vector.load %arg6[%c0_14, %c0_15] : memref<8x32xf32, #tpu.memory_space<vmem>>, vector<8x32xf32>
    tpu.vector_store %arg6[%c0_14, %c0_15], %30 {strides = array<i32>} : memref<8x32xf32, #tpu.memory_space<vmem>>, vector<8x32xf32>,
    return
  }
  func.func @transform_0(%arg0: i32) -> (i32, i32) {
    %c0_i32 = arith.constant 0 : i32
    %c0_i32_0 = arith.constant 0 : i32
    return %arg0, %c0_i32 : i32, i32
  }
  func.func @transform_1(%arg0: i32) -> (i32, i32) {
    %c0_i32 = arith.constant 0 : i32
    %c0_i32_0 = arith.constant 0 : i32
    %c0_i32_1 = arith.constant 0 : i32
    return %c0_i32, %c0_i32_0 : i32, i32
  }
  func.func @transform_2(%arg0: i32) -> (i32, i32) {
    %c0_i32 = arith.constant 0 : i32
    %c0_i32_0 = arith.constant 0 : i32
    %c0_i32_1 = arith.constant 0 : i32
    return %c0_i32, %c0_i32_0 : i32, i32
  }
  func.func @transform_3(%arg0: i32) -> (i32, i32) {
    %c0_i32 = arith.constant 0 : i32
    %c0_i32_0 = arith.constant 0 : i32
    %c0_i32_1 = arith.constant 0 : i32
    return %c0_i32, %c0_i32_0 : i32, i32
  }
  func.func @transform_4(%arg0: i32) -> (i32, i32) {
    %c0_i32 = arith.constant 0 : i32
    %c0_i32_0 = arith.constant 0 : i32
    %c0_i32_1 = arith.constant 0 : i32
    return %c0_i32, %c0_i32_0 : i32, i32
  }
  func.func @transform_5(%arg0: i32) -> (i32, i32) {
    %c0_i32 = arith.constant 0 : i32
    %c0_i32_0 = arith.constant 0 : i32
    return %arg0, %c0_i32 : i32, i32
  }
}

</mosaic_0001>

<llo_original>
// kernel: prenorm_forward.1
$region0: #{prenorm_forward.1}
  #allocation0 [shape = 'u32[]', space=smem, size = 0x4, offset = 0x4, fixed_abs, tag = 'smem constant byte address 0x4 - core index']
  #allocation1 [shape = 'u32[72,128]{1,0:T(1,128)}', space=vmem, size = 0x9000, scoped, tag = 'internal scratch']
  %s0 = inlined_call_operand.vmem [shape: f32[16,32], index: 0, kind: input, shape index: {}]
  %s1 = inlined_call_operand.vmem [shape: f32[1,32], index: 1, kind: input, shape index: {}]
  %s2 = inlined_call_operand.vmem [shape: f32[1,32], index: 2, kind: input, shape index: {}]
  %s3 = inlined_call_operand.vmem [shape: bf16[32,32], index: 3, kind: input, shape index: {}]
  %s4 = inlined_call_operand.vmem [shape: f32[1,32], index: 4, kind: input, shape index: {}]
  %s5 = inlined_call_operand.hbm [shape: f32[16,32], index: 5, kind: output, shape index: {}]
  %s6 = sld [smem:[#allocation0]]
  $region53: #{prenorm_forward.1} parent=0
    _
  %s8 = ssub.s32 1, %s6
  %s9 = scalar_select 0, %s8, %s6
  $region1: #{prenorm_forward.1} parent=0
    #allocation2 [shape = 'u8[8192]{0}', space=vmem, size = 0x2000, scoped, tag = 'output window, operand 0']
    #allocation3 [shape = 's32[2]{0}', space=sflag, size = 0x8, scoped, tag = 'scoped memory for prenorm_forward.1']
    %10 = vsyncpa [#allocation3], 0
    %s11 = scalar_lea.sflag [#allocation3], 1
    %12 = vsyncpa %s11, 0
    loop: start=0, step=1, limit=4
    $region2: #{prenorm_forward.1} parent=1 // loop_pre_header
      _
    $region3: #{prenorm_forward.1} parent=1 // loop_header
      %s14 = sphi 0, %s18
      %p15 = scmp.ge.s32.totalorder %s14, 4
      %s24 = sphi 0, %s26
      %s27 = sphi 0, %s24
      %s28 = sphi 0, %s27
      %s44 = sphi 0, %s28
      %s48 = sphi 0, %s48
      %s50 = sphi 0, %s48
      %s51 = sphi 0, %s50
      %s65 = sphi 0, %s51
      %s69 = sphi 0, %s69
      %s71 = sphi 0, %s69
      %s72 = sphi 0, %s71
      %s86 = sphi 0, %s72
      %s90 = sphi 0, %s90
      %s92 = sphi 0, %s90
      %s93 = sphi 0, %s92
      %s107 = sphi 0, %s93
      %s111 = sphi 0, %s111
      %s113 = sphi 0, %s111
      %s114 = sphi 0, %s113
      %s128 = sphi 0, %s114
      %s134 = sphi 0, %s136
      %s137 = sphi 0, %s134
      %s138 = sphi 0, %s137
      %s154 = sphi 0, %s138
    $region4: #{prenorm_forward.1} parent=1 // loop_header_branch
      %17 = sbr.rel (%p15) target = $region8
    $region5: #{prenorm_forward.1} parent=1 // loop_body
      %s19 = ssub.s32 %s14, 1
      %s20 = ssub.s32 %s14, 2
      %s21 = sadd.s32 %s14, 1
      %s22 = ssub.s32 %s14, %s21
      %p23 = scmp.eq.s32.totalorder %s22, 0
      %s25 = sadd.s32 %s24, 1
      %s26 = scalar_select %p23, %s24, %s25
      %p29 = pneg %p23
      %p30 = scmp.eq.s32.totalorder %s14, 1
      %p31 = por %p29, %p30
      %p32 = scmp.ne.s32.totalorder %s24, %s27
      %p33 = scmp.eq.s32.totalorder %s14, 0
      %p34 = por %p32, %p33
      %p35 = scmp.ne.s32.totalorder %s24, %s27
      %p36 = scmp.eq.s32.totalorder %s19, 1
      %p37 = por %p35, %p36
      %p38 = scmp.ne.s32.totalorder %s27, %s28
      %p39 = scmp.eq.s32.totalorder %s19, 0
      %p40 = por %p38, %p39
      %p41 = scmp.ne.s32.totalorder %s27, %s28
      %p42 = scmp.eq.s32.totalorder %s20, 1
      %p43 = por %p41, %p42
      %p45 = scmp.ne.s32.totalorder %s28, %s44
      %p46 = scmp.eq.s32.totalorder %s20, 0
      %p47 = por %p45, %p46
      %s49 = sadd.s32 %s48, 1
      %p52 = scmp.eq.s32.totalorder %s14, 1
      %p53 = scmp.ne.s32.totalorder %s48, %s50
      %p54 = scmp.eq.s32.totalorder %s14, 0
      %p55 = por %p53, %p54
      %p56 = scmp.ne.s32.totalorder %s48, %s50
      %p57 = scmp.eq.s32.totalorder %s19, 1
      %p58 = por %p56, %p57
      %p59 = scmp.ne.s32.totalorder %s50, %s51
      %p60 = scmp.eq.s32.totalorder %s19, 0
      %p61 = por %p59, %p60
      %p62 = scmp.ne.s32.totalorder %s50, %s51
      %p63 = scmp.eq.s32.totalorder %s20, 1
      %p64 = por %p62, %p63
      %p66 = scmp.ne.s32.totalorder %s51, %s65
      %p67 = scmp.eq.s32.totalorder %s20, 0
      %p68 = por %p66, %p67
      %s70 = sadd.s32 %s69, 1
      %p73 = scmp.eq.s32.totalorder %s14, 1
      %p74 = scmp.ne.s32.totalorder %s69, %s71
      %p75 = scmp.eq.s32.totalorder %s14, 0
      %p76 = por %p74, %p75
      %p77 = scmp.ne.s32.totalorder %s69, %s71
      %p78 = scmp.eq.s32.totalorder %s19, 1
      %p79 = por %p77, %p78
      %p80 = scmp.ne.s32.totalorder %s71, %s72
      %p81 = scmp.eq.s32.totalorder %s19, 0
      %p82 = por %p80, %p81
      %p83 = scmp.ne.s32.totalorder %s71, %s72
      %p84 = scmp.eq.s32.totalorder %s20, 1
      %p85 = por %p83, %p84
      %p87 = scmp.ne.s32.totalorder %s72, %s86
      %p88 = scmp.eq.s32.totalorder %s20, 0
      %p89 = por %p87, %p88
      %s91 = sadd.s32 %s90, 1
      %p94 = scmp.eq.s32.totalorder %s14, 1
      %p95 = scmp.ne.s32.totalorder %s90, %s92
      %p96 = scmp.eq.s32.totalorder %s14, 0
      %p97 = por %p95, %p96
      %p98 = scmp.ne.s32.totalorder %s90, %s92
      %p99 = scmp.eq.s32.totalorder %s19, 1
      %p100 = por %p98, %p99
      %p101 = scmp.ne.s32.totalorder %s92, %s93
      %p102 = scmp.eq.s32.totalorder %s19, 0
      %p103 = por %p101, %p102
      %p104 = scmp.ne.s32.totalorder %s92, %s93
      %p105 = scmp.eq.s32.totalorder %s20, 1
      %p106 = por %p104, %p105
      %p108 = scmp.ne.s32.totalorder %s93, %s107
      %p109 = scmp.eq.s32.totalorder %s20, 0
      %p110 = por %p108, %p109
      %s112 = sadd.s32 %s111, 1
      %p115 = scmp.eq.s32.totalorder %s14, 1
      %p116 = scmp.ne.s32.totalorder %s111, %s113
      %p117 = scmp.eq.s32.totalorder %s14, 0
      %p118 = por %p116, %p117
      %p119 = scmp.ne.s32.totalorder %s111, %s113
      %p120 = scmp.eq.s32.totalorder %s19, 1
      %p121 = por %p119, %p120
      %p122 = scmp.ne.s32.totalorder %s113, %s114
      %p123 = scmp.eq.s32.totalorder %s19, 0
      %p124 = por %p122, %p123
      %p125 = scmp.ne.s32.totalorder %s113, %s114
      %p126 = scmp.eq.s32.totalorder %s20, 1
      %p127 = por %p125, %p126
      %p129 = scmp.ne.s32.totalorder %s114, %s128
      %p130 = scmp.eq.s32.totalorder %s20, 0
      %p131 = por %p129, %p130
      %s132 = ssub.s32 %s14, %s21
      %p133 = scmp.eq.s32.totalorder %s132, 0
      %s135 = sadd.s32 %s134, 1
      %s136 = scalar_select %p133, %s134, %s135
      %p139 = pneg %p133
      %p140 = scmp.eq.s32.totalorder %s14, 1
      %p141 = por %p139, %p140
      %p142 = scmp.ne.s32.totalorder %s134, %s137
      %p143 = scmp.eq.s32.totalorder %s14, 0
      %p144 = por %p142, %p143
      %p145 = scmp.ne.s32.totalorder %s134, %s137
      %p146 = scmp.eq.s32.totalorder %s19, 1
      %p147 = por %p145, %p146
      %p148 = scmp.ne.s32.totalorder %s137, %s138
      %p149 = scmp.eq.s32.totalorder %s19, 0
      %p150 = por %p148, %p149
      %p151 = scmp.ne.s32.totalorder %s137, %s138
      %p152 = scmp.eq.s32.totalorder %s20, 1
      %p153 = por %p151, %p152
      %p155 = scmp.ne.s32.totalorder %s138, %s154
      %p156 = scmp.eq.s32.totalorder %s20, 0
      %p157 = por %p155, %p156
      %p158 = scmp.le.s32.totalorder 1, %s14
      %p159 = scmp.lt.s32.totalorder %s14, 3
      %p160 = pnand %p158, %p159
      %p161 = pneg %p160
      // Predicated region
      $region9: #{prenorm_forward.1} parent=5 // pred_check
        _
      $region10: #{prenorm_forward.1} parent=5 // pred_check_branch
        %163 = sbr.rel (%p160) target = $region12
      $region11: #{prenorm_forward.1} parent=5 // pred_region
        %s164 = ssub.s32 %s14, 1
        // Predicated region
        $region13: #{prenorm_forward.1} parent=11 // pred_check
          %p165 = pneg %p61
        $region14: #{prenorm_forward.1} parent=11 // pred_check_branch
          %167 = sbr.rel (%p165) target = $region16
        $region15: #{prenorm_forward.1} parent=11 // pred_region
          _
        $region16: #{prenorm_forward.1} parent=11 // pred_fallthru
          _
        // Predicated region
        $region17: #{prenorm_forward.1} parent=11 // pred_check
          %p168 = pneg %p82
        $region18: #{prenorm_forward.1} parent=11 // pred_check_branch
          %170 = sbr.rel (%p168) target = $region20
        $region19: #{prenorm_forward.1} parent=11 // pred_region
          _
        $region20: #{prenorm_forward.1} parent=11 // pred_fallthru
          _
        // Predicated region
        $region21: #{prenorm_forward.1} parent=11 // pred_check
          %p171 = pneg %p103
        $region22: #{prenorm_forward.1} parent=11 // pred_check_branch
          %173 = sbr.rel (%p171) target = $region24
        $region23: #{prenorm_forward.1} parent=11 // pred_region
          _
        $region24: #{prenorm_forward.1} parent=11 // pred_fallthru
          _
        // Predicated region
        $region25: #{prenorm_forward.1} parent=11 // pred_check
          %p174 = pneg %p124
        $region26: #{prenorm_forward.1} parent=11 // pred_check_branch
          %176 = sbr.rel (%p174) target = $region28
        $region27: #{prenorm_forward.1} parent=11 // pred_region
          _
        $region28: #{prenorm_forward.1} parent=11 // pred_fallthru
          _
      $region12: #{prenorm_forward.1} parent=5 // pred_fallthru
        _
      %p177 = scmp.lt.s32.totalorder %s14, 2
      // Predicated region
      $region29: #{prenorm_forward.1} parent=5 // pred_check
        %p178 = pneg %p177
      $region30: #{prenorm_forward.1} parent=5 // pred_check_branch
        %180 = sbr.rel (%p178) target = $region32
      $region31: #{prenorm_forward.1} parent=5 // pred_region
        // Predicated region
        $region33: #{prenorm_forward.1} parent=31 // pred_check
          %p181 = pneg %p34
        $region34: #{prenorm_forward.1} parent=31 // pred_check_branch
          %183 = sbr.rel (%p181) target = $region36
        $region35: #{prenorm_forward.1} parent=31 // pred_region
          %p184 = scmp.lt.s32.totalorder %s14, 1
          %s185 = scalar_select %p184, %s14, 1
          %s186 = smul.addr %s185, 8
          %s187 = scalar_lea.vmem %s0, %s186
        $region36: #{prenorm_forward.1} parent=31 // pred_fallthru
          _
      $region32: #{prenorm_forward.1} parent=5 // pred_fallthru
        _
      %p188 = scmp.le.s32.totalorder 1, %s14
      %p189 = scmp.lt.s32.totalorder %s14, 3
      %p190 = pnand %p188, %p189
      %p191 = pneg %p190
      // Predicated region
      $region37: #{prenorm_forward.1} parent=5 // pred_check
        _
      $region38: #{prenorm_forward.1} parent=5 // pred_check_branch
        %193 = sbr.rel (%p190) target = $region40
      $region39: #{prenorm_forward.1} parent=5 // pred_region
        %s194 = ssub.s32 %s14, 1
        %p195 = scmp.lt.s32.totalorder %s19, 1
        %s196 = scalar_select %p195, %s19, 1
        %s197 = smul.addr %s196, 8
        %s198 = scalar_lea.vmem %s0, %s197
        %p199 = pneg %p40
        %p200 = pneg %p37
        %p201 = pneg %p61
        %p202 = pneg %p58
        %p203 = pneg %p82
        %p204 = pneg %p79
        %p205 = pneg %p103
        %p206 = pneg %p100
        %p207 = pneg %p124
        %p208 = pneg %p121
        %p209 = pneg %p150
        %p210 = pneg %p147
        %s211 = sand.u32 %s137, 1
        %s212 = scalar_lea.sflag [#allocation3], %s211
        %s213 = sand.u32 %s137, 1
        %s214 = smul.addr %s213, 8
        %s215 = scalar_lea.vmem [#allocation2], %s214
        %p216 = scmp.lt.s32.totalorder %s19, 1
        %s217 = scalar_select %p216, %s19, 1
        %s218 = smul.addr %s217, 8
        %s219 = scalar_lea.vmem %s0, %s218
        %v221 = vld [vmem:[%s219] sm:$0xff]
        %vm222 = vcmask 261120
        %v223 = vsel %vm222, %v221, 0.0
        %224 = vadd.xlane.f32.xlu0 %v223
        %v225 = vpop.xlane.xlu0 %224
        %v226 = vrcp.pop 32.0
        %v227 = vmul.f32 32.0, %v226
        %v228 = vsub.f32 1.0, %v227
        %v229 = vmul.f32 %v226, %v228
        %v230 = vadd.f32 %v226, %v229
        %vm231 = vweird.f32 %v226
        %v232 = vsel %vm231, %v226, %v230
        %v233 = vmul.f32 %v225, %v232
        %v234 = vsub.f32 %v221, %v233
        %v235 = vmul.f32 %v234, %v234
        %v236 = vsel %vm222, %v235, 0.0
        %237 = vadd.xlane.f32.xlu0 %v236
        %v238 = vpop.xlane.xlu0 %237
        %v239 = vmul.f32 %v238, %v232
        %v240 = vadd.f32 %v239, 1e-05
        %v241 = vrsqrt.pop %v240
        %v242 = vmul.f32 %v241, %v240
        %v243 = vmul.f32 %v242, %v241
        %v244 = vmul.f32 0.5, %v243
        %v245 = vsub.f32 1.5, %v244
        %v246 = vmul.f32 %v241, %v245
        %vm247 = vweird.f32 %v240
        %vm248 = vweird.f32 %v241
        %vm249 = vmor %vm247, %vm248
        %v250 = vsel %vm249, %v241, %v246
        %v251 = vmul.f32 %v234, %v250
        %v252 = vld [vmem:[%s1] sm:$0x1]
        %v254 = vperm.slane %v252, 0
        %v256 = vmul.f32 %v251, %v254
        %v257 = vld [vmem:[%s2] sm:$0x1]
        %v259 = vperm.slane %v257, 0
        %v261 = vadd.f32 %v256, %v259
        %v262 = vpack.c.bf16 %v261, %v261
        %v263 = vld [vmem:[%s3] sm:$0xf]
        %v264 = vld [vmem:[%s3 + $0x4] sm:$0xf]
        %v265 = vld [vmem:[%s3 + $0x8] sm:$0xf]
        %v266 = vld [vmem:[%s3 + $0xc] sm:$0xf]
        %v267 = vld [vmem:[%s4] sm:$0x1]
        %v269 = vperm.slane %v267, 0
        %v275 = vunpack.c.l.b16 %v263
        %v276 = vunpack.c.l.b16 %v264
        %v277 = vunpack.c.l.b16 %v265
        %v278 = vunpack.c.l.b16 %v266
        %v279 = vpack.c.b16 %v276, %v275
        %v280 = vpack.c.b16 %v278, %v277
        %v284 = vsel %vm222, %v262, 0
        %286 = vmatpush.bf16.msra.mxu0 0
        %287 = vmatpush.bf16.msra.mxu0 0
        %288 = vmatpush.bf16.msra.mxu0 0
        %289 = vmatpush.bf16.msra.mxu0 0
        %290 = vmatpush.bf16.msra.mxu0 0
        %291 = vmatpush.bf16.msra.mxu0 0
        %292 = vmatpush.bf16.msra.mxu0 %v280
        %293 = vmatpush.bf16.msra.mxu0 %v279
        %294 = vmatmul.bf16.gmra.mxu0 %v284
        %v295 = vpop.f32.mrf.mxu0
        %v296 = vadd.f32 %v269, %v295
        %v297 = vpop.f32.mrf.mxu0
        %298 = vdwg.mxu0
        %299 = vst.msk [vmem:[%s215] sm:$0xff] %vm222, %v296
        %s300 = sand.u32 %s137, 1
        %s301 = scalar_lea.sflag [#allocation3], %s300
        %s302 = sand.u32 %s137, 1
        %s303 = smul.addr %s302, 8
        %s304 = scalar_lea.vmem [#allocation2], %s303
        // Predicated region
        $region41: #{prenorm_forward.1} parent=39 // pred_check
          %p305 = pneg %p147
        $region42: #{prenorm_forward.1} parent=39 // pred_check_branch
          %307 = sbr.rel (%p305) target = $region44
        $region43: #{prenorm_forward.1} parent=39 // pred_region
          %309 = vsyncadd %s301, 0
          %s310 = smul.addr %s19, 8
          %s311 = scalar_lea.hbm %s5, %s310
          %s313 = sshll.u32 %s304, 4
          %s314 = int_to_ptr.vmem [resolvable:$true] %s313
          %s315 = sshll.u32 %s311, 4
          %s316 = int_to_ptr.hbm [resolvable:$true] %s315
          %318 = dma.vmem_to_hbm [thread:$0]  %s314, 128, %s316, %s301
        $region44: #{prenorm_forward.1} parent=39 // pred_fallthru
          _
      $region40: #{prenorm_forward.1} parent=5 // pred_fallthru
        _
      %p319 = scmp.le.s32.totalorder 2, %s14
      // Predicated region
      $region45: #{prenorm_forward.1} parent=5 // pred_check
        %p320 = pneg %p319
      $region46: #{prenorm_forward.1} parent=5 // pred_check_branch
        %322 = sbr.rel (%p320) target = $region48
      $region47: #{prenorm_forward.1} parent=5 // pred_region
        %s323 = ssub.s32 %s14, 2
        // Predicated region
        $region49: #{prenorm_forward.1} parent=47 // pred_check
          %p324 = pneg %p153
        $region50: #{prenorm_forward.1} parent=47 // pred_check_branch
          %326 = sbr.rel (%p324) target = $region52
        $region51: #{prenorm_forward.1} parent=47 // pred_region
          %s327 = sand.u32 %s138, 1
          %s328 = scalar_lea.sflag [#allocation3], %s327
          %s329 = sand.u32 %s138, 1
          %s330 = smul.addr %s329, 8
          %s331 = scalar_lea.vmem [#allocation2], %s330
          %333 = dma.done %s328, 128
        $region52: #{prenorm_forward.1} parent=47 // pred_fallthru
          _
      $region48: #{prenorm_forward.1} parent=5 // pred_fallthru
        _
    $region6: #{prenorm_forward.1} parent=1 // loop_footer
      %s18 = sadd.s32 1, %s14
    $region7: #{prenorm_forward.1} parent=1 // loop_footer_branch
      %13 = sbr.rel target = $region3
    $region8: #{prenorm_forward.1} parent=1 // loop_exit
      _
    %334 = vsyncpa [#allocation3], 1
    %s335 = scalar_lea.sflag [#allocation3], 1
    %336 = vsyncpa %s335, 1

</llo_original>
